<compile_context>
chip_gen: v7x
topology: tpu7x:2x2x1
jax: 0.10.0
libtpu: 0.0.40
codegen_flags: <defaults>
</compile_context>

<pallas_src>
import functools

import jax
import jax.numpy as jnp
from jax.experimental import pallas as pl
from jax.experimental.pallas import tpu as pltpu

# Head class counts, matching MultiClassFc
N_MASK, N_GENDER, N_AGE = 3, 2, 6
N_TOTAL = N_MASK + N_GENDER + N_AGE  # 11
N_PAD = 128                          # lane-dense padded head width


# ---------------------------------------------------------------------------
# Kernels
# ---------------------------------------------------------------------------
def _head_kernel_single(x_ref, w_ref, b_ref, o_ref, *, inv_hw):
    """One-pass pool + fused 3-head linear.

    x_ref: (TB, HW, C) feature tile (channels last -> lane-dense loads)
    w_ref: (C, N_PAD)  concatenated [mask|gender|age] weights, zero-padded
    b_ref: (1, N_PAD)  concatenated biases, zero-padded
    o_ref: (TB, N_PAD) padded logits
    """
    feat = jnp.sum(x_ref[...], axis=1, dtype=jnp.float32) * jnp.float32(inv_hw)
    o_ref[...] = (jnp.dot(feat, w_ref[...], preferred_element_type=jnp.float32)
                  + b_ref[...])


def _head_kernel_tiled(x_ref, w_ref, b_ref, o_ref, acc_ref, *, inv_hw, hw, thw):
    """Spatially tiled pool (+ in-kernel ragged-tile mask) + fused head.

    acc_ref: (TB, C) f32 spatial-sum accumulator (VMEM scratch).
    """
    k = pl.program_id(1)

    @pl.when(k == 0)
    def _():
        acc_ref[...] = jnp.zeros_like(acc_ref)

    x = x_ref[...]                                   # (TB, THW, C)
    if hw % thw != 0:
        # Ragged last spatial tile: zero spatial rows past the true extent
        # (no wrapper-side jnp.pad -> no extra HBM round trip).
        pos = k * thw + jax.lax.broadcasted_iota(jnp.int32, x.shape, 1)
        x = jnp.where(pos < hw, x, jnp.zeros((), x.dtype))
    acc_ref[...] += jnp.sum(x, axis=1, dtype=jnp.float32)   # sublane VALU sum

    @pl.when(k == pl.num_programs(1) - 1)
    def _():
        feat = acc_ref[...] * jnp.float32(inv_hw)
        o_ref[...] = (jnp.dot(feat, w_ref[...],
                              preferred_element_type=jnp.float32)
                      + b_ref[...])


# ---------------------------------------------------------------------------
# Tiling / VMEM heuristics
# ---------------------------------------------------------------------------
def _tpu_vmem_capacity_bytes():
    cap = 64 * 1024 * 1024              # conservative default (v7x per-TC)
    try:
        info = pltpu.get_tpu_info()
        cap = int(getattr(info, "vmem_capacity_bytes", cap))
    except Exception:
        pass
    return cap


def _choose_tiles(B, C, HW, itemsize, budget, prefer_multi_step):
    """Pick (TB, THW) so one streamed input tile is <= `budget` bytes."""
    # Sublane alignment per dtype: f32 -> 8, bf16 -> 16, int8 -> 32.
    align = max(8, 32 // max(1, itemsize))

    # Layout-legal batch tiles for the (TB, 128) output block: multiples of 8
    # that divide B, plus the full batch (block == full dim is always legal).
    tbs = [t for t in range(8, B, 8) if B % t == 0] + [B]
    if prefer_multi_step:
        # v7x megacore: keep >= 2 steps on the "parallel" batch axis when a
        # legal tile size allows it.
        multi = [t for t in tbs if B // t >= 2]
        if multi:
            tbs = multi

    # Largest TB whose full-spatial tile fits -> single-pass kernel.
    best = None
    for t in tbs:
        if t * HW * C * itemsize <= budget:
            best = t
    if best is not None:
        return best, HW

    # Full-HW row block never fits: smallest legal TB, tile the spatial axis.
    tb = tbs[0]
    thw = (budget // (tb * C * itemsize)) // align * align
    thw = int(max(align, min(thw, HW)))
    return tb, thw


# ---------------------------------------------------------------------------
# Wrapper
# ---------------------------------------------------------------------------
def multi_head_classifier(feat_map, w_cat, b_cat, *, max_tile_bytes=None):
    """feat_map: (B, h, w, C) NHWC trunk feature map, or already (B, HW, C).

    Returns (mask_logits (B,3), gender_logits (B,2), age_logits (B,6)).
    """
    if feat_map.ndim == 4:
        B, h, w, C = feat_map.shape
        HW = h * w
        x = feat_map.reshape(B, HW, C)     # free reshape of NHWC
    else:
        B, HW, C = feat_map.shape
        x = feat_map
    itemsize = x.dtype.itemsize

    vmem_cap = _tpu_vmem_capacity_bytes()
    is_small_vmem = vmem_cap < 100 * 1024 * 1024      # v7x-like (64 MiB / TC)
    if max_tile_bytes is not None:
        budget = int(max_tile_bytes)
    elif is_small_vmem:
        budget = 12 * 1024 * 1024                     # v7x: 3.2 TB/s HBM
    else:
        budget = 16 * 1024 * 1024                     # v5e/v6e: 128 MiB VMEM

    TB, THW = _choose_tiles(B, C, HW, itemsize, budget,
                            prefer_multi_step=is_small_vmem)
    single_pass = (THW == HW)
    n_k = pl.cdiv(HW, THW)
    inv_hw = 1.0 / float(HW)

    # Lane-dense padded head: (C, 128) weights, (1, 128) bias; extra cols = 0.
    w_pad = jnp.zeros((C, N_PAD), jnp.float32).at[:, :N_TOTAL].set(
        w_cat.astype(jnp.float32))
    b_pad = jnp.zeros((1, N_PAD), jnp.float32).at[:, :N_TOTAL].set(
        b_cat.reshape(1, N_TOTAL).astype(jnp.float32))

    # NOTE: pipeline_mode=pl.Buffered(1) on the constant weight/bias specs
    # would drop one redundant VMEM buffer each; left at the default for
    # portability (VMEM-only, no bandwidth effect).
    if single_pass:
        kernel = functools.partial(_head_kernel_single, inv_hw=inv_hw)
        grid_spec = pltpu.PrefetchScalarGridSpec(
            num_scalar_prefetch=0,
            grid=(B // TB,),
            in_specs=[
                pl.BlockSpec((TB, HW, C), lambda i: (i, 0, 0)),
                pl.BlockSpec((C, N_PAD), lambda i: (0, 0)),
                pl.BlockSpec((1, N_PAD), lambda i: (0, 0)),
            ],
            out_specs=pl.BlockSpec((TB, N_PAD), lambda i: (i, 0)),
        )
        dim_sem = ("parallel",)
        scratch_bytes = 0
    else:
        kernel = functools.partial(_head_kernel_tiled, inv_hw=inv_hw,
                                   hw=HW, thw=THW)
        grid_spec = pltpu.PrefetchScalarGridSpec(
            num_scalar_prefetch=0,
            grid=(B // TB, n_k),
            in_specs=[
                pl.BlockSpec((TB, THW, C), lambda i, k: (i, k, 0)),
                pl.BlockSpec((C, N_PAD), lambda i, k: (0, 0)),
                pl.BlockSpec((1, N_PAD), lambda i, k: (0, 0)),
            ],
            out_specs=pl.BlockSpec((TB, N_PAD), lambda i, k: (i, 0)),
            scratch_shapes=[pltpu.VMEM((TB, C), jnp.float32)],
        )
        dim_sem = ("parallel", "arbitrary")
        scratch_bytes = TB * C * 4

    # VMEM request: double-buffered input tiles + constants + output + acc,
    # with margin, capped well below physical VMEM (compiler headroom).
    vmem_need = (2 * TB * THW * C * itemsize
                 + 2 * C * N_PAD * 4
                 + 2 * 8 * N_PAD * 4
                 + 2 * max(TB, 8) * N_PAD * 4
                 + scratch_bytes)
    vmem_limit = int(max(min(vmem_need + (4 << 20), vmem_cap - (12 << 20)),
                         16 << 20))

    cost = pl.CostEstimate(
        flops=int(B * HW * C + 2 * B * C * N_PAD),
        transcendentals=0,
        bytes_accessed=int(B * HW * C * itemsize
                           + C * N_PAD * 4 + B * N_PAD * 4),
    )

    out = pl.pallas_call(
        kernel,
        out_shape=jax.ShapeDtypeStruct((B, N_PAD), jnp.float32),
        grid_spec=grid_spec,
        compiler_params=pltpu.CompilerParams(
            dimension_semantics=dim_sem,
            vmem_limit_bytes=vmem_limit),
        cost_estimate=cost,
    )(x, w_pad, b_pad)

    return (out[:, :N_MASK],
            out[:, N_MASK:N_MASK + N_GENDER],
            out[:, N_MASK + N_GENDER:N_TOTAL])


def init_head_params(key, backbone_dim):
    """Deterministic init mimicking nn.Linear (uniform +/- 1/sqrt(fan_in))."""
    bound = 1.0 / jnp.sqrt(jnp.float32(backbone_dim))
    keys = jax.random.split(key, 6)
    ws, bs = [], []
    for i, n_cls in enumerate((N_MASK, N_GENDER, N_AGE)):
        wgt = jax.random.uniform(keys[2 * i], (backbone_dim, n_cls),
                                 jnp.float32, -bound, bound)
        b = jax.random.uniform(keys[2 * i + 1], (n_cls,),
                               jnp.float32, -bound, bound)
        ws.append(wgt)
        bs.append(b)
    w_cat = jnp.concatenate(ws, axis=1)   # (D, 11) columns = [mask|gender|age]
    b_cat = jnp.concatenate(bs, axis=0)   # (11,)
    return w_cat, b_cat


if __name__ == "__main__":
    key = jax.random.PRNGKey(0)
    k_feat, k_feat2, k_param = jax.random.split(key, 3)

    # Small shapes consistent with the head: batch=2, backbone_dim C=128,
    # 4x4 trunk feature map (NHWC, as an XLA-on-TPU conv trunk emits).
    B, h, w, C = 2, 4, 4, 128
    w_cat, b_cat = init_head_params(k_param, C)

    def reference(fm):
        feat = jnp.mean(fm.astype(jnp.float32).reshape(fm.shape[0], -1, C),
                        axis=1)
        return feat @ w_cat + b_cat

    # 1) f32 feature map — single-pass path.
    fm32 = jax.random.normal(k_feat, (B, h, w, C), dtype=jnp.float32)
    mask, gender, age = multi_head_classifier(fm32, w_cat, b_cat)
    jax.block_until_ready((mask, gender, age))
    assert mask.shape == (B, N_MASK)
    assert gender.shape == (B, N_GENDER)
    assert age.shape == (B, N_AGE)
    got = jnp.concatenate([mask, gender, age], axis=1)
    assert jnp.allclose(got, reference(fm32), atol=1e-4, rtol=1e-4)

    # 2) bf16 feature map (recommended streaming dtype) — single-pass path.
    fm16 = fm32.astype(jnp.bfloat16)
    mask, gender, age = multi_head_classifier(fm16, w_cat, b_cat)
    jax.block_until_ready((mask, gender, age))
    got = jnp.concatenate([mask, gender, age], axis=1)
    assert jnp.allclose(got, reference(fm16), atol=2e-2, rtol=2e-2)

    # 3) Ragged spatial extent with a tiny forced tile budget — exercises the
    #    tiled/accumulator path and the in-kernel ragged-tile mask (no pad).
    h2, w2 = 5, 4                       # HW = 20, not a multiple of the tile
    fm_r = jax.random.normal(k_feat2, (B, h2, w2, C), dtype=jnp.float32)
    mask, gender, age = multi_head_classifier(fm_r, w_cat, b_cat,
                                              max_tile_bytes=8 * 1024)
    jax.block_until_ready((mask, gender, age))
    got = jnp.concatenate([mask, gender, age], axis=1)
    assert jnp.allclose(got, reference(fm_r), atol=1e-4, rtol=1e-4)

    print("KERNEL_OK")
</pallas_src>

<mosaic_0001>
module attributes {stable_mosaic.version = 11 : i64} {
  func.func @_head_kernel_single(%arg0: i32, %arg1: memref<2x16x128xf32, #tpu.memory_space<vmem>>, %arg2: memref<128x128xf32, #tpu.memory_space<vmem>>, %arg3: memref<1x128xf32, #tpu.memory_space<vmem>>, %arg4: memref<2x128xf32, #tpu.memory_space<vmem>>) attributes {dimension_semantics = [#tpu.dimension_semantics<parallel>], iteration_bounds = array<i64: 1>, scalar_prefetch = 0 : i64, scratch_operands = 0 : i64, tpu.core_type = #tpu.core_type<tc>, window_params = [{transform_indices = @transform_0, window_bounds = array<i64: 2, 16, 128>}, {pipeline_mode = #tpu.pipeline_mode<synchronous>, transform_indices = @transform_1, window_bounds = array<i64: 128, 128>}, {pipeline_mode = #tpu.pipeline_mode<synchronous>, transform_indices = @transform_2, window_bounds = array<i64: 1, 128>}, {transform_indices = @transform_3, window_bounds = array<i64: 2, 128>}]} {
    %c0 = arith.constant 0 : index
    %c0_0 = arith.constant 0 : index
    %c0_1 = arith.constant 0 : index
    %0 = vector.load %arg1[%c0, %c0_0, %c0_1] : memref<2x16x128xf32, #tpu.memory_space<vmem>>, vector<2x16x128xf32>
    %cst = arith.constant dense<0.000000e+00> : vector<2x128xf32>
    %1 = vector.multi_reduction <add>, %0, %cst [1] : vector<2x16x128xf32> to vector<2x128xf32>
    %cst_2 = arith.constant 6.250000e-02 : f32
    %2 = vector.broadcast %cst_2 : f32 to vector<2x128xf32>
    %3 = arith.mulf %1, %2 : vector<2x128xf32>
    %c0_3 = arith.constant 0 : index
    %c0_4 = arith.constant 0 : index
    %4 = vector.load %arg2[%c0_3, %c0_4] : memref<128x128xf32, #tpu.memory_space<vmem>>, vector<128x128xf32>
    %cst_5 = arith.constant dense<0.000000e+00> : vector<2x128xf32>
    %5 = tpu.matmul %3, %4, %cst_5 {dimension_numbers = #tpu.dot_dimension_numbers<[1], [0], [0], [1], [0, 0, 1, 1], [], []>} : vector<2x128xf32>, vector<128x128xf32>, vector<2x128xf32> -> vector<2x128xf32>
    %c0_6 = arith.constant 0 : index
    %c0_7 = arith.constant 0 : index
    %6 = vector.load %arg3[%c0_6, %c0_7] : memref<1x128xf32, #tpu.memory_space<vmem>>, vector<1x128xf32>
    %7 = vector.broadcast %6 : vector<1x128xf32> to vector<2x128xf32>
    %8 = arith.addf %5, %7 : vector<2x128xf32>
    %c0_8 = arith.constant 0 : index
    %c0_9 = arith.constant 0 : index
    %9 = vector.load %arg4[%c0_8, %c0_9] : memref<2x128xf32, #tpu.memory_space<vmem>>, vector<2x128xf32>
    tpu.vector_store %arg4[%c0_8, %c0_9], %8 {strides = array<i32>} : memref<2x128xf32, #tpu.memory_space<vmem>>, vector<2x128xf32>,
    return
  }
  func.func @transform_0(%arg0: i32) -> (i32, i32, i32) {
    %c0_i32 = arith.constant 0 : i32
    %c0_i32_0 = arith.constant 0 : i32
    %c0_i32_1 = arith.constant 0 : i32
    return %arg0, %c0_i32, %c0_i32_0 : i32, i32, i32
  }
  func.func @transform_1(%arg0: i32) -> (i32, i32) {
    %c0_i32 = arith.constant 0 : i32
    %c0_i32_0 = arith.constant 0 : i32
    %c0_i32_1 = arith.constant 0 : i32
    return %c0_i32, %c0_i32_0 : i32, i32
  }
  func.func @transform_2(%arg0: i32) -> (i32, i32) {
    %c0_i32 = arith.constant 0 : i32
    %c0_i32_0 = arith.constant 0 : i32
    %c0_i32_1 = arith.constant 0 : i32
    return %c0_i32, %c0_i32_0 : i32, i32
  }
  func.func @transform_3(%arg0: i32) -> (i32, i32) {
    %c0_i32 = arith.constant 0 : i32
    %c0_i32_0 = arith.constant 0 : i32
    return %arg0, %c0_i32 : i32, i32
  }
}

</mosaic_0001>

<llo_original>
// kernel: tpu_custom_call.1
$region0: #{tpu_custom_call.1}
  #allocation0 [shape = 'u32[]', space=smem, size = 0x4, offset = 0x4, fixed_abs, tag = 'smem constant byte address 0x4 - core index']
  #allocation1 [shape = 'u32[144,128]{1,0:T(1,128)}', space=vmem, size = 0x12000, scoped, tag = 'internal scratch']
  %s0 = inlined_call_operand.hbm [shape: f32[2,16,128], index: 0, kind: input, shape index: {}]
  %s1 = inlined_call_operand.hbm [shape: f32[128,128], index: 1, kind: input, shape index: {}]
  %s2 = inlined_call_operand.vmem [shape: f32[1,128], index: 2, kind: input, shape index: {}]
  %s3 = inlined_call_operand.hbm [shape: f32[2,128], index: 3, kind: output, shape index: {}]
  %s4 = sld [smem:[#allocation0]]
  $region30: #{tpu_custom_call.1} parent=0
    _
  %s6 = ssub.s32 1, %s4
  %s7 = scalar_select 0, %s6, %s4
  $region1: #{tpu_custom_call.1} parent=0
    #allocation2 [shape = 'u8[16384]{0}', space=vmem, size = 0x4000, scoped, tag = 'input window, operand 0, single buffered']
    #allocation3 [shape = 's32[1]{0}', space=sflag, size = 0x4, scoped, tag = 'scoped memory for tpu_custom_call.1']
    #allocation4 [shape = 's32[1]{0}', space=sflag, size = 0x4, scoped, tag = 'scoped memory for tpu_custom_call.1']
    #allocation5 [shape = 'u8[65536]{0}', space=vmem, size = 0x10000, scoped, tag = 'input window, operand 1, single buffered']
    #allocation6 [shape = 's32[1]{0}', space=sflag, size = 0x4, scoped, tag = 'scoped memory for tpu_custom_call.1']
    #allocation7 [shape = 'u8[1024]{0}', space=vmem, size = 0x400, scoped, tag = 'output window, operand 0, single buffered']
    %8 = vsyncpa [#allocation3], 0
    %9 = vsyncpa [#allocation6], 0
    %10 = vsyncpa [#allocation4], 0
    // Predicated region
    $region2: #{tpu_custom_call.1} parent=1 // pred_check
      _
    $region3: #{tpu_custom_call.1} parent=1 // pred_check_branch
      %12 = sbr.rel (0) target = $region5
    $region4: #{tpu_custom_call.1} parent=1 // pred_region
      %s14 = ssub.s32 512, 512
      %15 = vsyncadd [#allocation3], %s14
      %s16 = sshll.u32 [#allocation2], 4
      %s17 = int_to_ptr.vmem [resolvable:$true] %s16
      %22 = dma.hbm_to_vmem [thread:$0]  %s0, 512, %s17, [#allocation3], 128, 128, 8
    $region5: #{tpu_custom_call.1} parent=1 // pred_fallthru
      _
    // Predicated region
    $region6: #{tpu_custom_call.1} parent=1 // pred_check
      _
    $region7: #{tpu_custom_call.1} parent=1 // pred_check_branch
      %24 = sbr.rel (0) target = $region9
    $region8: #{tpu_custom_call.1} parent=1 // pred_region
      %s26 = ssub.s32 2048, 2048
      %27 = vsyncadd [#allocation6], %s26
      %s28 = sshll.u32 [#allocation5], 4
      %s29 = int_to_ptr.vmem [resolvable:$true] %s28
      %34 = dma.hbm_to_vmem [thread:$0]  %s1, 2048, %s29, [#allocation6], 128, 128, 8
    $region9: #{tpu_custom_call.1} parent=1 // pred_fallthru
      _
    // Predicated region
    $region10: #{tpu_custom_call.1} parent=1 // pred_check
      _
    $region11: #{tpu_custom_call.1} parent=1 // pred_check_branch
      %36 = sbr.rel (0) target = $region13
    $region12: #{tpu_custom_call.1} parent=1 // pred_region
      _
    $region13: #{tpu_custom_call.1} parent=1 // pred_fallthru
      _
    // Predicated region
    $region14: #{tpu_custom_call.1} parent=1 // pred_check
      _
    $region15: #{tpu_custom_call.1} parent=1 // pred_check_branch
      %38 = sbr.rel (0) target = $region17
    $region16: #{tpu_custom_call.1} parent=1 // pred_region
      %39 = dma.done [#allocation3], 512
    $region17: #{tpu_custom_call.1} parent=1 // pred_fallthru
      _
    // Predicated region
    $region18: #{tpu_custom_call.1} parent=1 // pred_check
      _
    $region19: #{tpu_custom_call.1} parent=1 // pred_check_branch
      %41 = sbr.rel (0) target = $region21
    $region20: #{tpu_custom_call.1} parent=1 // pred_region
      %42 = dma.done [#allocation6], 2048
    $region21: #{tpu_custom_call.1} parent=1 // pred_fallthru
      _
    %v43 = vld [vmem:[#allocation2] sm:$0xff]
    %v44 = vld [vmem:[#allocation2 + $0x8] sm:$0xff]
    %v45 = vld [vmem:[#allocation2 + $0x10] sm:$0xff]
    %v46 = vld [vmem:[#allocation2 + $0x18] sm:$0xff]
    %v47 = vadd.f32 %v43, %v44
    %v48 = vrot.slane %v47, 4
    %v49 = vadd.f32 %v47, %v48
    %v50 = vrot.slane %v49, 2
    %v51 = vadd.f32 %v49, %v50
    %v52 = vrot.slane %v51, 1
    %v53 = vadd.f32 %v51, %v52
    %v54 = vadd.f32 %v45, %v46
    %v55 = vrot.slane %v54, 4
    %v56 = vadd.f32 %v54, %v55
    %v57 = vrot.slane %v56, 2
    %v58 = vadd.f32 %v56, %v57
    %v59 = vrot.slane %v58, 1
    %v60 = vadd.f32 %v58, %v59
    %v61 = vmul.f32 %v53, 0.0625
    %v62 = vmul.f32 %v60, 0.0625
    %v63 = vld [vmem:[#allocation5] sm:$0xff]
    %v64 = vld [vmem:[#allocation5 + $0x8] sm:$0xff]
    %v65 = vld [vmem:[#allocation5 + $0x10] sm:$0xff]
    %v66 = vld [vmem:[#allocation5 + $0x18] sm:$0xff]
    %v67 = vld [vmem:[#allocation5 + $0x20] sm:$0xff]
    %v68 = vld [vmem:[#allocation5 + $0x28] sm:$0xff]
    %v69 = vld [vmem:[#allocation5 + $0x30] sm:$0xff]
    %v70 = vld [vmem:[#allocation5 + $0x38] sm:$0xff]
    %v71 = vld [vmem:[#allocation5 + $0x40] sm:$0xff]
    %v72 = vld [vmem:[#allocation5 + $0x48] sm:$0xff]
    %v73 = vld [vmem:[#allocation5 + $0x50] sm:$0xff]
    %v74 = vld [vmem:[#allocation5 + $0x58] sm:$0xff]
    %v75 = vld [vmem:[#allocation5 + $0x60] sm:$0xff]
    %v76 = vld [vmem:[#allocation5 + $0x68] sm:$0xff]
    %v77 = vld [vmem:[#allocation5 + $0x70] sm:$0xff]
    %v78 = vld [vmem:[#allocation5 + $0x78] sm:$0xff]
    %v79 = vld [vmem:[%s2] sm:$0x1]
    %v81 = vlaneseq
    %v82 = vshrl.u32 %v81, 7
    %v83 = vsub.s32 0, %v82
    %v84 = vrot.slane %v79, %v83
    %vm88 = vcmask 1041409
    %v89 = vsel %vm88, %v62, %v61
    %91 = vmatprep.subr.mxu0 0.0
    %92 = vmatpush1.msra.mxu0 %v63
    %93 = vmatprep.subr.mxu0 0.0
    %94 = vmatpush1.msra.mxu0 %v64
    %95 = vmatprep.subr.mxu0 0.0
    %96 = vmatpush1.msra.mxu0 %v65
    %97 = vmatprep.subr.mxu0 0.0
    %98 = vmatpush1.msra.mxu0 %v66
    %99 = vmatprep.subr.mxu0 0.0
    %100 = vmatpush1.msra.mxu0 %v67
    %101 = vmatprep.subr.mxu0 0.0
    %102 = vmatpush1.msra.mxu0 %v68
    %103 = vmatprep.subr.mxu0 0.0
    %104 = vmatpush1.msra.mxu0 %v69
    %105 = vmatprep.subr.mxu0 0.0
    %106 = vmatpush1.msra.mxu0 %v70
    %107 = vmatprep.subr.mxu0 0.0
    %108 = vmatpush1.msra.mxu0 %v71
    %109 = vmatprep.subr.mxu0 0.0
    %110 = vmatpush1.msra.mxu0 %v72
    %111 = vmatprep.subr.mxu0 0.0
    %112 = vmatpush1.msra.mxu0 %v73
    %113 = vmatprep.subr.mxu0 0.0
    %114 = vmatpush1.msra.mxu0 %v74
    %115 = vmatprep.subr.mxu0 0.0
    %116 = vmatpush1.msra.mxu0 %v75
    %117 = vmatprep.subr.mxu0 0.0
    %118 = vmatpush1.msra.mxu0 %v76
    %119 = vmatprep.subr.mxu0 0.0
    %120 = vmatpush1.msra.mxu0 %v77
    %121 = vmatprep.subr.mxu0 0.0
    %122 = vmatpush1.msra.mxu0 %v78
    %123 = vmatprep.subr.mxu0 0.0
    %124 = vmatpush1.msra.mxu0 0.0
    %125 = vmatprep.subr.mxu0 0.0
    %126 = vmatpush1.msra.mxu0 0.0
    %127 = vmatprep.subr.mxu0 0.0
    %128 = vmatpush1.msra.mxu0 0.0
    %129 = vmatprep.subr.mxu0 0.0
    %130 = vmatpush1.msra.mxu0 0.0
    %131 = vmatprep.subr.mxu0 0.0
    %132 = vmatpush1.msra.mxu0 0.0
    %133 = vmatprep.subr.mxu0 0.0
    %134 = vmatpush1.msra.mxu0 0.0
    %135 = vmatprep.subr.mxu0 0.0
    %136 = vmatpush1.msra.mxu0 0.0
    %137 = vmatprep.subr.mxu0 0.0
    %138 = vmatpush1.msra.mxu0 0.0
    %139 = vmatprep.subr.mxu0 0.0
    %140 = vmatpush1.msra.mxu0 0.0
    %141 = vmatprep.subr.mxu0 0.0
    %142 = vmatpush1.msra.mxu0 0.0
    %143 = vmatprep.subr.mxu0 0.0
    %144 = vmatpush1.msra.mxu0 0.0
    %145 = vmatprep.subr.mxu0 0.0
    %146 = vmatpush1.msra.mxu0 0.0
    %147 = vmatprep.subr.mxu0 0.0
    %148 = vmatpush1.msra.mxu0 0.0
    %149 = vmatprep.subr.mxu0 0.0
    %150 = vmatpush1.msra.mxu0 0.0
    %151 = vmatprep.subr.mxu0 0.0
    %152 = vmatpush1.msra.mxu0 0.0
    %153 = vmatprep.subr.mxu0 0.0
    %154 = vmatpush1.msra.mxu0 0.0
    %155 = vmatprep.mubr.f32.mxu0 0.0
    %156 = vmatmul.mubr.f32.gmra.mrb[0].mxu0 %v89
    %v157 = vpop.f32.mrb[0].mxu0
    %v158 = vadd.f32 %v84, %v157
    %v159 = vpop.f32.mrb[0].mxu0
    %160 = vdwg.mxu0
    %161 = vst [vmem:[#allocation7] sm:$0x3] %v158
    // Predicated region
    $region22: #{tpu_custom_call.1} parent=1 // pred_check
      _
    $region23: #{tpu_custom_call.1} parent=1 // pred_check_branch
      %163 = sbr.rel (0) target = $region25
    $region24: #{tpu_custom_call.1} parent=1 // pred_region
      %s165 = ssub.s32 32, 32
      %166 = vsyncadd [#allocation4], %s165
      %s168 = sshll.u32 [#allocation7], 4
      %s169 = int_to_ptr.vmem [resolvable:$true] %s168
      %171 = dma.vmem_to_hbm [thread:$0]  %s169, 32, %s3, [#allocation4]
    $region25: #{tpu_custom_call.1} parent=1 // pred_fallthru
      _
    // Predicated region
    $region26: #{tpu_custom_call.1} parent=1 // pred_check
      _
    $region27: #{tpu_custom_call.1} parent=1 // pred_check_branch
      %173 = sbr.rel (0) target = $region29
    $region28: #{tpu_custom_call.1} parent=1 // pred_region
      %174 = dma.done [#allocation4], 32
    $region29: #{tpu_custom_call.1} parent=1 // pred_fallthru
      _
    %175 = vsyncpa [#allocation3], 1
    %176 = vsyncpa [#allocation6], 1
    %177 = vsyncpa [#allocation4], 1

</llo_original>
